<compile_context>
chip_gen: v6e
topology: v6e:2x2x1
jax: 0.10.0
libtpu: 0.0.40
codegen_flags: <defaults>
</compile_context>

<pallas_src>
import jax
import jax.numpy as jnp
from jax import lax
from jax.experimental import pallas as pl
from jax.experimental.pallas import tpu as pltpu


def mlp_kernel(x_ref, w1_ref, b1_ref, w2_ref, b2_ref, w3_ref, b3_ref, o_ref):
    # x_ref: (TM, dim) f32, batch on sublanes.  Weights are PyTorch-layout
    # (out, in); biases are (out, 1).  Everything after the first dot keeps the
    # batch on the LANE axis, so VPU/EUP work and the output store are dense.
    x = x_ref[...]

    # Layer 1: (16, dim) . (TM, dim)^T -> (16, TM)  (A @ B^T MXU pattern; no
    # explicit transpose of the x tile needed).
    h1 = lax.dot_general(w1_ref[...], x,
                         dimension_numbers=(((1,), (1,)), ((), ())),
                         preferred_element_type=jnp.float32)
    h1 = jnp.maximum(h1 + b1_ref[...], 0.0)                      # (16, TM)

    # Layer 2: (8, 16) @ (16, TM) -> (8, TM)
    h2 = jnp.dot(w2_ref[...], h1,
                 preferred_element_type=jnp.float32) + b2_ref[...]
    h2 = jnp.maximum(h2, 0.0)                                    # (8, TM)

    # Layer 3 + sigmoid: (1, 8) @ (8, TM) -> (1, TM), lane-dense store.
    z = jnp.dot(w3_ref[...], h2,
                preferred_element_type=jnp.float32) + b3_ref[...]
    o_ref[...] = jax.nn.sigmoid(z)


def _round_up(n, m):
    return ((n + m - 1) // m) * m


def credit_card_forward(x, params, *, tile_m=8192):
    """x: (batch, dim) f32. params: PyTorch-layout weights (out, in), biases (out, 1)."""
    batch, dim = x.shape

    # Row tile: multiple of 128 so the (tile_m, dim) x block and the lane-dense
    # (1, tile_m) output block satisfy the (8, 128) block constraint.
    tile_m = max(128, min(_round_up(tile_m, 128), _round_up(batch, 128)))
    # v7x megacore: the "parallel" grid axis is split across both TensorCores,
    # so prefer >=2 grid steps whenever the batch allows it.
    if pl.cdiv(batch, tile_m) == 1 and batch > 128:
        tile_m = max(128, _round_up(pl.cdiv(batch, 2), 128))
    grid = (pl.cdiv(batch, tile_m),)  # ragged tail handled by Pallas edge masking

    w1, b1 = params["w1"], params["b1"]
    w2, b2 = params["w2"], params["b2"]
    w3, b3 = params["w3"], params["b3"]

    flops = 2 * batch * (dim * 16 + 16 * 8 + 8 * 1)
    bytes_accessed = (batch * dim * 4          # f32 x stream
                      + batch * 4              # f32 output
                      + 4 * (dim * 16 + 16 + 16 * 8 + 8 + 8 + 1))

    const = lambda i: (0, 0)  # weights/biases stay VMEM-resident across the grid

    out = pl.pallas_call(
        mlp_kernel,
        out_shape=jax.ShapeDtypeStruct((1, batch), jnp.float32),
        grid=grid,
        in_specs=[
            pl.BlockSpec((tile_m, dim), lambda i: (i, 0)),  # x: streamed per tile
            pl.BlockSpec((16, dim), const),                 # w1
            pl.BlockSpec((16, 1), const),                   # b1
            pl.BlockSpec((8, 16), const),                   # w2
            pl.BlockSpec((8, 1), const),                    # b2
            pl.BlockSpec((1, 8), const),                    # w3
            pl.BlockSpec((1, 1), const),                    # b3
        ],
        out_specs=pl.BlockSpec((1, tile_m), lambda i: (0, i)),
        compiler_params=pltpu.CompilerParams(
            dimension_semantics=("parallel",),
            vmem_limit_bytes=32 * 1024 * 1024),
        cost_estimate=pl.CostEstimate(
            flops=flops, transcendentals=batch, bytes_accessed=bytes_accessed),
    )(x, w1, b1, w2, b2, w3, b3)

    # (1, batch) lane-major slab -> (batch, 1); output bytes are negligible.
    return out.reshape(batch, 1)


def init_params(dim, key):
    """Deterministic init mirroring nn.Linear: weight (out, in), bias (out, 1),
    both uniform(-1/sqrt(fan_in), 1/sqrt(fan_in))."""
    k1, k2, k3, k4, k5, k6 = jax.random.split(key, 6)

    def uinit(k, shape, fan_in):
        bound = 1.0 / jnp.sqrt(jnp.float32(fan_in))
        return jax.random.uniform(k, shape, jnp.float32, -bound, bound)

    return {
        "w1": uinit(k1, (16, dim), dim), "b1": uinit(k2, (16, 1), dim),
        "w2": uinit(k3, (8, 16), 16),    "b2": uinit(k4, (8, 1), 16),
        "w3": uinit(k5, (1, 8), 8),      "b3": uinit(k6, (1, 1), 8),
    }


def reference_forward(x, p):
    # Plain f32 JAX mirror of the PyTorch forward.
    h1 = jnp.maximum(x @ p["w1"].T + p["b1"].T, 0.0)
    h2 = jnp.maximum(h1 @ p["w2"].T + p["b2"].T, 0.0)
    return jax.nn.sigmoid(h2 @ p["w3"].T + p["b3"].T)


if __name__ == "__main__":
    # Small demo: 300 = 2*128 + 44 exercises a multi-step grid with a ragged
    # (masked) tail block; production callers use the default 8K-row tiles.
    batch, dim = 300, 32
    key = jax.random.PRNGKey(0)
    kx, kp = jax.random.split(key)
    x = jax.random.normal(kx, (batch, dim), jnp.float32)
    params = init_params(dim, kp)

    out = credit_card_forward(x, params, tile_m=128)
    out = jax.block_until_ready(out)

    ref = reference_forward(x, params)
    assert out.shape == (batch, 1)
    err = float(jnp.max(jnp.abs(out - ref)))
    # Tolerance covers the TPU's default f32-matmul handling (bf16-operand MXU
    # passes with f32 accumulation) possibly differing between Mosaic and XLA;
    # a wiring/semantics bug would be orders of magnitude larger.
    assert err < 2e-3, err
    print("KERNEL_OK")
</pallas_src>

<mosaic_0001>
module attributes {stable_mosaic.version = 11 : i64} {
  func.func @mlp_kernel(%arg0: i32, %arg1: memref<128x32xf32, #tpu.memory_space<vmem>>, %arg2: memref<16x32xf32, #tpu.memory_space<vmem>>, %arg3: memref<16x1xf32, #tpu.memory_space<vmem>>, %arg4: memref<8x16xf32, #tpu.memory_space<vmem>>, %arg5: memref<8x1xf32, #tpu.memory_space<vmem>>, %arg6: memref<1x8xf32, #tpu.memory_space<vmem>>, %arg7: memref<1x1xf32, #tpu.memory_space<vmem>>, %arg8: memref<1x128xf32, #tpu.memory_space<vmem>>) attributes {dimension_semantics = [#tpu.dimension_semantics<parallel>], iteration_bounds = array<i64: 3>, scalar_prefetch = 0 : i64, scratch_operands = 0 : i64, tpu.core_type = #tpu.core_type<tc>, window_params = [{transform_indices = @transform_0, window_bounds = array<i64: 128, 32>}, {pipeline_mode = #tpu.pipeline_mode<synchronous>, transform_indices = @transform_1, window_bounds = array<i64: 16, 32>}, {pipeline_mode = #tpu.pipeline_mode<synchronous>, transform_indices = @transform_2, window_bounds = array<i64: 16, 1>}, {pipeline_mode = #tpu.pipeline_mode<synchronous>, transform_indices = @transform_3, window_bounds = array<i64: 8, 16>}, {pipeline_mode = #tpu.pipeline_mode<synchronous>, transform_indices = @transform_4, window_bounds = array<i64: 8, 1>}, {pipeline_mode = #tpu.pipeline_mode<synchronous>, transform_indices = @transform_5, window_bounds = array<i64: 1, 8>}, {pipeline_mode = #tpu.pipeline_mode<synchronous>, transform_indices = @transform_6, window_bounds = array<i64: 1, 1>}, {transform_indices = @transform_7, window_bounds = array<i64: 1, 128>}]} {
    %c0 = arith.constant 0 : index
    %c0_0 = arith.constant 0 : index
    %0 = vector.load %arg1[%c0, %c0_0] : memref<128x32xf32, #tpu.memory_space<vmem>>, vector<128x32xf32>
    %c0_1 = arith.constant 0 : index
    %c0_2 = arith.constant 0 : index
    %1 = vector.load %arg2[%c0_1, %c0_2] : memref<16x32xf32, #tpu.memory_space<vmem>>, vector<16x32xf32>
    %cst = arith.constant dense<0.000000e+00> : vector<16x128xf32>
    %2 = tpu.matmul %1, %0, %cst {dimension_numbers = #tpu.dot_dimension_numbers<[1], [1], [0], [0], [0, 0, 1, 0], [], []>} : vector<16x32xf32>, vector<128x32xf32>, vector<16x128xf32> -> vector<16x128xf32>
    %c0_3 = arith.constant 0 : index
    %c0_4 = arith.constant 0 : index
    %3 = vector.load %arg3[%c0_3, %c0_4] : memref<16x1xf32, #tpu.memory_space<vmem>>, vector<16x1xf32>
    %4 = vector.broadcast %3 : vector<16x1xf32> to vector<16x128xf32>
    %5 = arith.addf %2, %4 : vector<16x128xf32>
    %cst_5 = arith.constant 0.000000e+00 : f32
    %6 = vector.broadcast %cst_5 : f32 to vector<16x128xf32>
    %7 = arith.maximumf %5, %6 : vector<16x128xf32>
    %c0_6 = arith.constant 0 : index
    %c0_7 = arith.constant 0 : index
    %8 = vector.load %arg4[%c0_6, %c0_7] : memref<8x16xf32, #tpu.memory_space<vmem>>, vector<8x16xf32>
    %cst_8 = arith.constant dense<0.000000e+00> : vector<8x128xf32>
    %9 = tpu.matmul %8, %7, %cst_8 {dimension_numbers = #tpu.dot_dimension_numbers<[1], [0], [0], [1], [0, 0, 1, 1], [], []>} : vector<8x16xf32>, vector<16x128xf32>, vector<8x128xf32> -> vector<8x128xf32>
    %c0_9 = arith.constant 0 : index
    %c0_10 = arith.constant 0 : index
    %10 = vector.load %arg5[%c0_9, %c0_10] : memref<8x1xf32, #tpu.memory_space<vmem>>, vector<8x1xf32>
    %11 = vector.broadcast %10 : vector<8x1xf32> to vector<8x128xf32>
    %12 = arith.addf %9, %11 : vector<8x128xf32>
    %cst_11 = arith.constant 0.000000e+00 : f32
    %13 = vector.broadcast %cst_11 : f32 to vector<8x128xf32>
    %14 = arith.maximumf %12, %13 : vector<8x128xf32>
    %c0_12 = arith.constant 0 : index
    %c0_13 = arith.constant 0 : index
    %15 = vector.load %arg6[%c0_12, %c0_13] : memref<1x8xf32, #tpu.memory_space<vmem>>, vector<1x8xf32>
    %cst_14 = arith.constant dense<0.000000e+00> : vector<1x128xf32>
    %16 = tpu.matmul %15, %14, %cst_14 {dimension_numbers = #tpu.dot_dimension_numbers<[1], [0], [0], [1], [0, 0, 1, 1], [], []>} : vector<1x8xf32>, vector<8x128xf32>, vector<1x128xf32> -> vector<1x128xf32>
    %c0_15 = arith.constant 0 : index
    %c0_16 = arith.constant 0 : index
    %17 = vector.load %arg7[%c0_15, %c0_16] : memref<1x1xf32, #tpu.memory_space<vmem>>, vector<1x1xf32>
    %18 = vector.broadcast %17 : vector<1x1xf32> to vector<1x128xf32>
    %19 = arith.addf %16, %18 : vector<1x128xf32>
    %20 = arith.negf %19 : vector<1x128xf32>
    %21 = math.exp %20 : vector<1x128xf32>
    %cst_17 = arith.constant 1.000000e+00 : f32
    %22 = vector.broadcast %cst_17 : f32 to vector<1x128xf32>
    %23 = arith.addf %22, %21 : vector<1x128xf32>
    %24 = arith.divf %22, %23 : vector<1x128xf32>
    %c0_18 = arith.constant 0 : index
    %c0_19 = arith.constant 0 : index
    %25 = vector.load %arg8[%c0_18, %c0_19] : memref<1x128xf32, #tpu.memory_space<vmem>>, vector<1x128xf32>
    tpu.vector_store %arg8[%c0_18, %c0_19], %24 {strides = array<i32>} : memref<1x128xf32, #tpu.memory_space<vmem>>, vector<1x128xf32>,
    return
  }
  func.func @transform_0(%arg0: i32) -> (i32, i32) {
    %c0_i32 = arith.constant 0 : i32
    %c0_i32_0 = arith.constant 0 : i32
    return %arg0, %c0_i32 : i32, i32
  }
  func.func @transform_1(%arg0: i32) -> (i32, i32) {
    %c0_i32 = arith.constant 0 : i32
    %c0_i32_0 = arith.constant 0 : i32
    %c0_i32_1 = arith.constant 0 : i32
    return %c0_i32, %c0_i32_0 : i32, i32
  }
  func.func @transform_2(%arg0: i32) -> (i32, i32) {
    %c0_i32 = arith.constant 0 : i32
    %c0_i32_0 = arith.constant 0 : i32
    %c0_i32_1 = arith.constant 0 : i32
    return %c0_i32, %c0_i32_0 : i32, i32
  }
  func.func @transform_3(%arg0: i32) -> (i32, i32) {
    %c0_i32 = arith.constant 0 : i32
    %c0_i32_0 = arith.constant 0 : i32
    %c0_i32_1 = arith.constant 0 : i32
    return %c0_i32, %c0_i32_0 : i32, i32
  }
  func.func @transform_4(%arg0: i32) -> (i32, i32) {
    %c0_i32 = arith.constant 0 : i32
    %c0_i32_0 = arith.constant 0 : i32
    %c0_i32_1 = arith.constant 0 : i32
    return %c0_i32, %c0_i32_0 : i32, i32
  }
  func.func @transform_5(%arg0: i32) -> (i32, i32) {
    %c0_i32 = arith.constant 0 : i32
    %c0_i32_0 = arith.constant 0 : i32
    %c0_i32_1 = arith.constant 0 : i32
    return %c0_i32, %c0_i32_0 : i32, i32
  }
  func.func @transform_6(%arg0: i32) -> (i32, i32) {
    %c0_i32 = arith.constant 0 : i32
    %c0_i32_0 = arith.constant 0 : i32
    %c0_i32_1 = arith.constant 0 : i32
    return %c0_i32, %c0_i32_0 : i32, i32
  }
  func.func @transform_7(%arg0: i32) -> (i32, i32) {
    %c0_i32 = arith.constant 0 : i32
    %c0_i32_0 = arith.constant 0 : i32
    return %c0_i32, %arg0 : i32, i32
  }
}

</mosaic_0001>

<llo_original>
// kernel: tpu_custom_call.1
$region0: #{tpu_custom_call.1}
  #allocation0 [shape = 'u32[]', space=smem, size = 0x4, offset = 0x4, fixed_abs, tag = 'smem constant byte address 0x4 - core index']
  #allocation1 [shape = 'u32[144,128]{1,0:T(1,128)}', space=vmem, size = 0x12000, scoped, tag = 'internal scratch']
  #allocation2 [shape = 'f32[1,1]{1,0:T(1,128)S(1)}', space=vmem, size = 0x200, scoped, tag = 'scoped memory for tpu_custom_call.1']
  %s0 = inlined_call_operand.vmem [shape: f32[300,32], index: 0, kind: input, shape index: {}]
  %s1 = inlined_call_operand.vmem [shape: f32[16,32], index: 1, kind: input, shape index: {}]
  %s2 = inlined_call_operand.vmem [shape: f32[16,1], index: 2, kind: input, shape index: {}]
  %s3 = inlined_call_operand.vmem [shape: f32[8,16], index: 3, kind: input, shape index: {}]
  %s4 = inlined_call_operand.vmem [shape: f32[8,1], index: 4, kind: input, shape index: {}]
  %s5 = inlined_call_operand.vmem [shape: f32[1,8], index: 5, kind: input, shape index: {}]
  %s6 = inlined_call_operand.<no memory space> [shape: f32[1,1], index: 6, kind: input, shape index: {}]
  %s7 = inlined_call_operand.hbm [shape: f32[1,300], index: 7, kind: output, shape index: {}]
  %s8 = sld [smem:[#allocation0]]
  $region61: #{tpu_custom_call.1} parent=0
    _
  %s10 = ssub.s32 1, %s8
  %s11 = scalar_select 0, %s10, %s8
  %v12 = vstv %s6
  %13 = vst [vmem:[#allocation2] sm:$0x1] %v12
  $region1: #{tpu_custom_call.1} parent=0
    #allocation3 [shape = 'u8[1024]{0}', space=vmem, size = 0x400, scoped, tag = 'output window, operand 0']
    #allocation4 [shape = 's32[2]{0}', space=sflag, size = 0x8, scoped, tag = 'scoped memory for tpu_custom_call.1']
    %14 = vsyncpa [#allocation4], 0
    %s15 = scalar_lea.sflag [#allocation4], 1
    %16 = vsyncpa %s15, 0
    loop: start=0, step=1, limit=5
    $region2: #{tpu_custom_call.1} parent=1 // loop_pre_header
      _
    $region3: #{tpu_custom_call.1} parent=1 // loop_header
      %s18 = sphi 0, %s22
      %p19 = scmp.ge.s32.totalorder %s18, 5
      %s28 = sphi 0, %s30
      %s31 = sphi 0, %s28
      %s32 = sphi 0, %s31
      %s48 = sphi 0, %s32
      %s52 = sphi 0, %s52
      %s54 = sphi 0, %s52
      %s55 = sphi 0, %s54
      %s69 = sphi 0, %s55
      %s73 = sphi 0, %s73
      %s75 = sphi 0, %s73
      %s76 = sphi 0, %s75
      %s90 = sphi 0, %s76
      %s94 = sphi 0, %s94
      %s96 = sphi 0, %s94
      %s97 = sphi 0, %s96
      %s111 = sphi 0, %s97
      %s115 = sphi 0, %s115
      %s117 = sphi 0, %s115
      %s118 = sphi 0, %s117
      %s132 = sphi 0, %s118
      %s136 = sphi 0, %s136
      %s138 = sphi 0, %s136
      %s139 = sphi 0, %s138
      %s153 = sphi 0, %s139
      %s157 = sphi 0, %s157
      %s159 = sphi 0, %s157
      %s160 = sphi 0, %s159
      %s174 = sphi 0, %s160
      %s180 = sphi 0, %s182
      %s183 = sphi 0, %s180
      %s184 = sphi 0, %s183
      %s200 = sphi 0, %s184
    $region4: #{tpu_custom_call.1} parent=1 // loop_header_branch
      %21 = sbr.rel (%p19) target = $region8
    $region5: #{tpu_custom_call.1} parent=1 // loop_body
      %s23 = ssub.s32 %s18, 1
      %s24 = ssub.s32 %s18, 2
      %s25 = sadd.s32 %s18, 1
      %s26 = ssub.s32 %s18, %s25
      %p27 = scmp.eq.s32.totalorder %s26, 0
      %s29 = sadd.s32 %s28, 1
      %s30 = scalar_select %p27, %s28, %s29
      %p33 = pneg %p27
      %p34 = scmp.eq.s32.totalorder %s18, 2
      %p35 = por %p33, %p34
      %p36 = scmp.ne.s32.totalorder %s28, %s31
      %p37 = scmp.eq.s32.totalorder %s18, 0
      %p38 = por %p36, %p37
      %p39 = scmp.ne.s32.totalorder %s28, %s31
      %p40 = scmp.eq.s32.totalorder %s23, 2
      %p41 = por %p39, %p40
      %p42 = scmp.ne.s32.totalorder %s31, %s32
      %p43 = scmp.eq.s32.totalorder %s23, 0
      %p44 = por %p42, %p43
      %p45 = scmp.ne.s32.totalorder %s31, %s32
      %p46 = scmp.eq.s32.totalorder %s24, 2
      %p47 = por %p45, %p46
      %p49 = scmp.ne.s32.totalorder %s32, %s48
      %p50 = scmp.eq.s32.totalorder %s24, 0
      %p51 = por %p49, %p50
      %s53 = sadd.s32 %s52, 1
      %p56 = scmp.eq.s32.totalorder %s18, 2
      %p57 = scmp.ne.s32.totalorder %s52, %s54
      %p58 = scmp.eq.s32.totalorder %s18, 0
      %p59 = por %p57, %p58
      %p60 = scmp.ne.s32.totalorder %s52, %s54
      %p61 = scmp.eq.s32.totalorder %s23, 2
      %p62 = por %p60, %p61
      %p63 = scmp.ne.s32.totalorder %s54, %s55
      %p64 = scmp.eq.s32.totalorder %s23, 0
      %p65 = por %p63, %p64
      %p66 = scmp.ne.s32.totalorder %s54, %s55
      %p67 = scmp.eq.s32.totalorder %s24, 2
      %p68 = por %p66, %p67
      %p70 = scmp.ne.s32.totalorder %s55, %s69
      %p71 = scmp.eq.s32.totalorder %s24, 0
      %p72 = por %p70, %p71
      %s74 = sadd.s32 %s73, 1
      %p77 = scmp.eq.s32.totalorder %s18, 2
      %p78 = scmp.ne.s32.totalorder %s73, %s75
      %p79 = scmp.eq.s32.totalorder %s18, 0
      %p80 = por %p78, %p79
      %p81 = scmp.ne.s32.totalorder %s73, %s75
      %p82 = scmp.eq.s32.totalorder %s23, 2
      %p83 = por %p81, %p82
      %p84 = scmp.ne.s32.totalorder %s75, %s76
      %p85 = scmp.eq.s32.totalorder %s23, 0
      %p86 = por %p84, %p85
      %p87 = scmp.ne.s32.totalorder %s75, %s76
      %p88 = scmp.eq.s32.totalorder %s24, 2
      %p89 = por %p87, %p88
      %p91 = scmp.ne.s32.totalorder %s76, %s90
      %p92 = scmp.eq.s32.totalorder %s24, 0
      %p93 = por %p91, %p92
      %s95 = sadd.s32 %s94, 1
      %p98 = scmp.eq.s32.totalorder %s18, 2
      %p99 = scmp.ne.s32.totalorder %s94, %s96
      %p100 = scmp.eq.s32.totalorder %s18, 0
      %p101 = por %p99, %p100
      %p102 = scmp.ne.s32.totalorder %s94, %s96
      %p103 = scmp.eq.s32.totalorder %s23, 2
      %p104 = por %p102, %p103
      %p105 = scmp.ne.s32.totalorder %s96, %s97
      %p106 = scmp.eq.s32.totalorder %s23, 0
      %p107 = por %p105, %p106
      %p108 = scmp.ne.s32.totalorder %s96, %s97
      %p109 = scmp.eq.s32.totalorder %s24, 2
      %p110 = por %p108, %p109
      %p112 = scmp.ne.s32.totalorder %s97, %s111
      %p113 = scmp.eq.s32.totalorder %s24, 0
      %p114 = por %p112, %p113
      %s116 = sadd.s32 %s115, 1
      %p119 = scmp.eq.s32.totalorder %s18, 2
      %p120 = scmp.ne.s32.totalorder %s115, %s117
      %p121 = scmp.eq.s32.totalorder %s18, 0
      %p122 = por %p120, %p121
      %p123 = scmp.ne.s32.totalorder %s115, %s117
      %p124 = scmp.eq.s32.totalorder %s23, 2
      %p125 = por %p123, %p124
      %p126 = scmp.ne.s32.totalorder %s117, %s118
      %p127 = scmp.eq.s32.totalorder %s23, 0
      %p128 = por %p126, %p127
      %p129 = scmp.ne.s32.totalorder %s117, %s118
      %p130 = scmp.eq.s32.totalorder %s24, 2
      %p131 = por %p129, %p130
      %p133 = scmp.ne.s32.totalorder %s118, %s132
      %p134 = scmp.eq.s32.totalorder %s24, 0
      %p135 = por %p133, %p134
      %s137 = sadd.s32 %s136, 1
      %p140 = scmp.eq.s32.totalorder %s18, 2
      %p141 = scmp.ne.s32.totalorder %s136, %s138
      %p142 = scmp.eq.s32.totalorder %s18, 0
      %p143 = por %p141, %p142
      %p144 = scmp.ne.s32.totalorder %s136, %s138
      %p145 = scmp.eq.s32.totalorder %s23, 2
      %p146 = por %p144, %p145
      %p147 = scmp.ne.s32.totalorder %s138, %s139
      %p148 = scmp.eq.s32.totalorder %s23, 0
      %p149 = por %p147, %p148
      %p150 = scmp.ne.s32.totalorder %s138, %s139
      %p151 = scmp.eq.s32.totalorder %s24, 2
      %p152 = por %p150, %p151
      %p154 = scmp.ne.s32.totalorder %s139, %s153
      %p155 = scmp.eq.s32.totalorder %s24, 0
      %p156 = por %p154, %p155
      %s158 = sadd.s32 %s157, 1
      %p161 = scmp.eq.s32.totalorder %s18, 2
      %p162 = scmp.ne.s32.totalorder %s157, %s159
      %p163 = scmp.eq.s32.totalorder %s18, 0
      %p164 = por %p162, %p163
      %p165 = scmp.ne.s32.totalorder %s157, %s159
      %p166 = scmp.eq.s32.totalorder %s23, 2
      %p167 = por %p165, %p166
      %p168 = scmp.ne.s32.totalorder %s159, %s160
      %p169 = scmp.eq.s32.totalorder %s23, 0
      %p170 = por %p168, %p169
      %p171 = scmp.ne.s32.totalorder %s159, %s160
      %p172 = scmp.eq.s32.totalorder %s24, 2
      %p173 = por %p171, %p172
      %p175 = scmp.ne.s32.totalorder %s160, %s174
      %p176 = scmp.eq.s32.totalorder %s24, 0
      %p177 = por %p175, %p176
      %s178 = ssub.s32 %s18, %s25
      %p179 = scmp.eq.s32.totalorder %s178, 0
      %s181 = sadd.s32 %s180, 1
      %s182 = scalar_select %p179, %s180, %s181
      %p185 = pneg %p179
      %p186 = scmp.eq.s32.totalorder %s18, 2
      %p187 = por %p185, %p186
      %p188 = scmp.ne.s32.totalorder %s180, %s183
      %p189 = scmp.eq.s32.totalorder %s18, 0
      %p190 = por %p188, %p189
      %p191 = scmp.ne.s32.totalorder %s180, %s183
      %p192 = scmp.eq.s32.totalorder %s23, 2
      %p193 = por %p191, %p192
      %p194 = scmp.ne.s32.totalorder %s183, %s184
      %p195 = scmp.eq.s32.totalorder %s23, 0
      %p196 = por %p194, %p195
      %p197 = scmp.ne.s32.totalorder %s183, %s184
      %p198 = scmp.eq.s32.totalorder %s24, 2
      %p199 = por %p197, %p198
      %p201 = scmp.ne.s32.totalorder %s184, %s200
      %p202 = scmp.eq.s32.totalorder %s24, 0
      %p203 = por %p201, %p202
      %p204 = scmp.le.s32.totalorder 1, %s18
      %p205 = scmp.lt.s32.totalorder %s18, 4
      %p206 = pnand %p204, %p205
      %p207 = pneg %p206
      // Predicated region
      $region9: #{tpu_custom_call.1} parent=5 // pred_check
        _
      $region10: #{tpu_custom_call.1} parent=5 // pred_check_branch
        %209 = sbr.rel (%p206) target = $region12
      $region11: #{tpu_custom_call.1} parent=5 // pred_region
        %s210 = ssub.s32 %s18, 1
        // Predicated region
        $region13: #{tpu_custom_call.1} parent=11 // pred_check
          %p211 = pneg %p65
        $region14: #{tpu_custom_call.1} parent=11 // pred_check_branch
          %213 = sbr.rel (%p211) target = $region16
        $region15: #{tpu_custom_call.1} parent=11 // pred_region
          _
        $region16: #{tpu_custom_call.1} parent=11 // pred_fallthru
          _
        // Predicated region
        $region17: #{tpu_custom_call.1} parent=11 // pred_check
          %p214 = pneg %p86
        $region18: #{tpu_custom_call.1} parent=11 // pred_check_branch
          %216 = sbr.rel (%p214) target = $region20
        $region19: #{tpu_custom_call.1} parent=11 // pred_region
          _
        $region20: #{tpu_custom_call.1} parent=11 // pred_fallthru
          _
        // Predicated region
        $region21: #{tpu_custom_call.1} parent=11 // pred_check
          %p217 = pneg %p107
        $region22: #{tpu_custom_call.1} parent=11 // pred_check_branch
          %219 = sbr.rel (%p217) target = $region24
        $region23: #{tpu_custom_call.1} parent=11 // pred_region
          _
        $region24: #{tpu_custom_call.1} parent=11 // pred_fallthru
          _
        // Predicated region
        $region25: #{tpu_custom_call.1} parent=11 // pred_check
          %p220 = pneg %p128
        $region26: #{tpu_custom_call.1} parent=11 // pred_check_branch
          %222 = sbr.rel (%p220) target = $region28
        $region27: #{tpu_custom_call.1} parent=11 // pred_region
          _
        $region28: #{tpu_custom_call.1} parent=11 // pred_fallthru
          _
        // Predicated region
        $region29: #{tpu_custom_call.1} parent=11 // pred_check
          %p223 = pneg %p149
        $region30: #{tpu_custom_call.1} parent=11 // pred_check_branch
          %225 = sbr.rel (%p223) target = $region32
        $region31: #{tpu_custom_call.1} parent=11 // pred_region
          _
        $region32: #{tpu_custom_call.1} parent=11 // pred_fallthru
          _
        // Predicated region
        $region33: #{tpu_custom_call.1} parent=11 // pred_check
          %p226 = pneg %p170
        $region34: #{tpu_custom_call.1} parent=11 // pred_check_branch
          %228 = sbr.rel (%p226) target = $region36
        $region35: #{tpu_custom_call.1} parent=11 // pred_region
          _
        $region36: #{tpu_custom_call.1} parent=11 // pred_fallthru
          _
      $region12: #{tpu_custom_call.1} parent=5 // pred_fallthru
        _
      %p229 = scmp.lt.s32.totalorder %s18, 3
      // Predicated region
      $region37: #{tpu_custom_call.1} parent=5 // pred_check
        %p230 = pneg %p229
      $region38: #{tpu_custom_call.1} parent=5 // pred_check_branch
        %232 = sbr.rel (%p230) target = $region40
      $region39: #{tpu_custom_call.1} parent=5 // pred_region
        // Predicated region
        $region41: #{tpu_custom_call.1} parent=39 // pred_check
          %p233 = pneg %p38
        $region42: #{tpu_custom_call.1} parent=39 // pred_check_branch
          %235 = sbr.rel (%p233) target = $region44
        $region43: #{tpu_custom_call.1} parent=39 // pred_region
          %s236 = smul.u32 16, %s18
          %s237 = ssub.s32 38, %s236
          %p238 = scmp.lt.s32.totalorder %s237, 16
          %s239 = scalar_select %p238, %s237, 16
          %s240 = smul.u32 128, %s239
          %p241 = scmp.lt.s32.totalorder %s236, 37
          %s242 = scalar_select %p241, %s236, 37
          %s243 = smul.addr %s242, 8
          %s244 = scalar_lea.vmem %s0, %s243
          %s245 = smul.u32 16, %s18
          %s246 = ssub.s32 38, %s245
          %p247 = scmp.lt.s32.totalorder %s246, 16
          %s248 = scalar_select %p247, %s246, 16
          %s249 = smul.u32 128, %s248
        $region44: #{tpu_custom_call.1} parent=39 // pred_fallthru
          _
      $region40: #{tpu_custom_call.1} parent=5 // pred_fallthru
        _
      %p250 = scmp.le.s32.totalorder 1, %s18
      %p251 = scmp.lt.s32.totalorder %s18, 4
      %p252 = pnand %p250, %p251
      %p253 = pneg %p252
      // Predicated region
      $region45: #{tpu_custom_call.1} parent=5 // pred_check
        _
      $region46: #{tpu_custom_call.1} parent=5 // pred_check_branch
        %255 = sbr.rel (%p252) target = $region48
      $region47: #{tpu_custom_call.1} parent=5 // pred_region
        %s256 = ssub.s32 %s18, 1
        %s257 = smul.u32 16, %s23
        %s258 = ssub.s32 38, %s257
        %p259 = scmp.lt.s32.totalorder %s258, 16
        %s260 = scalar_select %p259, %s258, 16
        %s261 = smul.u32 128, %s260
        %p262 = scmp.lt.s32.totalorder %s257, 37
        %s263 = scalar_select %p262, %s257, 37
        %s264 = smul.addr %s263, 8
        %s265 = scalar_lea.vmem %s0, %s264
        %p266 = pneg %p44
        %p267 = pneg %p41
        %p268 = pneg %p65
        %p269 = pneg %p62
        %p270 = pneg %p86
        %p271 = pneg %p83
        %p272 = pneg %p107
        %p273 = pneg %p104
        %p274 = pneg %p128
        %p275 = pneg %p125
        %p276 = pneg %p149
        %p277 = pneg %p146
        %p278 = pneg %p170
        %p279 = pneg %p167
        %p280 = pneg %p196
        %p281 = pneg %p193
        %s282 = sand.u32 %s183, 1
        %s283 = scalar_lea.sflag [#allocation4], %s282
        %s284 = sand.u32 %s183, 1
        %s285 = scalar_lea.vmem [#allocation3], %s284
        %s286 = smul.u32 16, %s23
        %s287 = ssub.s32 38, %s286
        %p288 = scmp.lt.s32.totalorder %s287, 16
        %s289 = scalar_select %p288, %s287, 16
        %s290 = smul.u32 128, %s289
        %p291 = scmp.lt.s32.totalorder %s286, 37
        %s292 = scalar_select %p291, %s286, 37
        %s293 = smul.addr %s292, 8
        %s294 = scalar_lea.vmem %s0, %s293
        %s295 = smul.u32 16, %s23
        %s296 = ssub.s32 38, %s295
        %p297 = scmp.lt.s32.totalorder %s296, 16
        %s298 = scalar_select %p297, %s296, 16
        %s299 = smul.u32 128, %s298
        %v300 = vld [vmem:[%s294] sm:$0xff]
        %v301 = vld [vmem:[%s294 + $0x8] sm:$0xff]
        %v302 = vld [vmem:[%s294 + $0x10] sm:$0xff]
        %v303 = vld [vmem:[%s294 + $0x18] sm:$0xff]
        %v304 = vld [vmem:[%s294 + $0x20] sm:$0xff]
        %v305 = vld [vmem:[%s294 + $0x28] sm:$0xff]
        %v306 = vld [vmem:[%s294 + $0x30] sm:$0xff]
        %v307 = vld [vmem:[%s294 + $0x38] sm:$0xff]
        %v308 = vld [vmem:[%s294 + $0x40] sm:$0xff]
        %v309 = vld [vmem:[%s294 + $0x48] sm:$0xff]
        %v310 = vld [vmem:[%s294 + $0x50] sm:$0xff]
        %v311 = vld [vmem:[%s294 + $0x58] sm:$0xff]
        %v312 = vld [vmem:[%s294 + $0x60] sm:$0xff]
        %v313 = vld [vmem:[%s294 + $0x68] sm:$0xff]
        %v314 = vld [vmem:[%s294 + $0x70] sm:$0xff]
        %v315 = vld [vmem:[%s294 + $0x78] sm:$0xff]
        %v316 = vld [vmem:[%s1] sm:$0xff]
        %v317 = vld [vmem:[%s1 + $0x8] sm:$0xff]
        %v318 = vld [vmem:[%s2] sm:$0xff]
        %v319 = vld [vmem:[%s2 + $0x8] sm:$0xff]
        %321 = vset.pattern.permute.xlu0 0
        %322 = vperm.xlu0 %321, %v318
        %v323 = vpop.permute.xlu0 %322
        %326 = vset.pattern.permute.xlu0 0
        %327 = vperm.xlu0 %326, %v319
        %v328 = vpop.permute.xlu0 %327
        %vm330 = vcmask 261120
        %v332 = vsel %vm330, %v316, 0
        %v335 = vsel %vm330, %v317, 0
        %v338 = vsel %vm330, %v300, 0
        %v341 = vsel %vm330, %v301, 0
        %v344 = vsel %vm330, %v302, 0
        %v347 = vsel %vm330, %v303, 0
        %v350 = vsel %vm330, %v304, 0
        %v353 = vsel %vm330, %v305, 0
        %v356 = vsel %vm330, %v306, 0
        %v359 = vsel %vm330, %v307, 0
        %v362 = vsel %vm330, %v308, 0
        %v365 = vsel %vm330, %v309, 0
        %v368 = vsel %vm330, %v310, 0
        %v371 = vsel %vm330, %v311, 0
        %v374 = vsel %vm330, %v312, 0
        %v377 = vsel %vm330, %v313, 0
        %v380 = vsel %vm330, %v314, 0
        %v383 = vsel %vm330, %v315, 0
        %385 = vmatprep.subr.mxu0 0.0
        %386 = vmatpush1.xpose.msra.mxu0 %v383
        %387 = vmatprep.subr.mxu0 0.0
        %388 = vmatpush1.xpose.msra.mxu0 %v380
        %389 = vmatprep.subr.mxu0 0.0
        %390 = vmatpush1.xpose.msra.mxu0 %v377
        %391 = vmatprep.subr.mxu0 0.0
        %392 = vmatpush1.xpose.msra.mxu0 %v374
        %393 = vmatprep.subr.mxu0 0.0
        %394 = vmatpush1.xpose.msra.mxu0 %v371
        %395 = vmatprep.subr.mxu0 0.0
        %396 = vmatpush1.xpose.msra.mxu0 %v368
        %397 = vmatprep.subr.mxu0 0.0
        %398 = vmatpush1.xpose.msra.mxu0 %v365
        %399 = vmatprep.subr.mxu0 0.0
        %400 = vmatpush1.xpose.msra.mxu0 %v362
        %401 = vmatprep.subr.mxu0 0.0
        %402 = vmatpush1.xpose.msra.mxu0 %v359
        %403 = vmatprep.subr.mxu0 0.0
        %404 = vmatpush1.xpose.msra.mxu0 %v356
        %405 = vmatprep.subr.mxu0 0.0
        %406 = vmatpush1.xpose.msra.mxu0 %v353
        %407 = vmatprep.subr.mxu0 0.0
        %408 = vmatpush1.xpose.msra.mxu0 %v350
        %409 = vmatprep.subr.mxu0 0.0
        %410 = vmatpush1.xpose.msra.mxu0 %v347
        %411 = vmatprep.subr.mxu0 0.0
        %412 = vmatpush1.xpose.msra.mxu0 %v344
        %413 = vmatprep.subr.mxu0 0.0
        %414 = vmatpush1.xpose.msra.mxu0 %v341
        %415 = vmatprep.subr.mxu0 0.0
        %416 = vmatpush1.xpose.msra.mxu0 %v338
        %417 = vmatprep.subr.mxu0 0.0
        %418 = vmatpush2.xpose.msra.mxu0 0.0
        %419 = vmatprep.subr.mxu0 0.0
        %420 = vmatpush2.xpose.msra.mxu0 0.0
        %421 = vmatprep.subr.mxu0 0.0
        %422 = vmatpush2.xpose.msra.mxu0 0.0
        %423 = vmatprep.subr.mxu0 0.0
        %424 = vmatpush2.xpose.msra.mxu0 0.0
        %425 = vmatprep.subr.mxu0 0.0
        %426 = vmatpush2.xpose.msra.mxu0 0.0
        %427 = vmatprep.subr.mxu0 0.0
        %428 = vmatpush2.xpose.msra.mxu0 0.0
        %429 = vmatprep.subr.mxu0 0.0
        %430 = vmatpush2.xpose.msra.mxu0 0.0
        %431 = vmatprep.subr.mxu0 0.0
        %432 = vmatpush2.xpose.msra.mxu0 0.0
        %433 = vmatprep.subr.mxu0 0.0
        %434 = vmatpush2.xpose.msra.mxu0 0.0
        %435 = vmatprep.subr.mxu0 0.0
        %436 = vmatpush2.xpose.msra.mxu0 0.0
        %437 = vmatprep.subr.mxu0 0.0
        %438 = vmatpush2.xpose.msra.mxu0 0.0
        %439 = vmatprep.subr.mxu0 0.0
        %440 = vmatpush2.xpose.msra.mxu0 0.0
        %441 = vmatprep.subr.mxu0 0.0
        %442 = vmatpush2.xpose.msra.mxu0 0.0
        %443 = vmatprep.subr.mxu0 0.0
        %444 = vmatpush2.xpose.msra.mxu0 0.0
        %445 = vmatprep.subr.mxu0 0.0
        %446 = vmatpush2.xpose.msra.mxu0 0.0
        %447 = vmatprep.subr.mxu0 0.0
        %448 = vmatpush2.xpose.msra.mxu0 0.0
        %449 = vmatprep.mubr.f32.mxu0 0.0
        %450 = vmatmul.mubr.f32.gmra.mxu0 %v332
        %v451 = vpop.f32.mrf.mxu0
        %v452 = vadd.f32 %v323, %v451
        %v453 = vpop.f32.mrf.mxu0
        %454 = vmatprep.mubr.f32.mxu0 0.0
        %455 = vmatmul.mubr.f32.gmra.mxu0 %v335
        %v456 = vpop.f32.mrf.mxu0
        %v457 = vadd.f32 %v328, %v456
        %v458 = vpop.f32.mrf.mxu0
        %459 = vdwg.mxu0
        %v460 = vmax.f32 %v452, 0.0
        %v461 = vmax.f32 %v457, 0.0
        %v462 = vld [vmem:[%s3] sm:$0xff]
        %v463 = vld [vmem:[%s4] sm:$0xff]
        %465 = vset.pattern.permute.xlu0 0
        %466 = vperm.xlu0 %465, %v463
        %v467 = vpop.permute.xlu0 %466
        %vm469 = vcmask 130048
        %v471 = vsel %vm469, %v462, 0
        %473 = vmatprep.subr.mxu0 0.0
        %474 = vmatpush1.msra.mxu0 0.0
        %475 = vmatprep.subr.mxu0 0.0
        %476 = vmatpush1.msra.mxu0 0.0
        %477 = vmatprep.subr.mxu0 0.0
        %478 = vmatpush1.msra.mxu0 0.0
        %479 = vmatprep.subr.mxu0 0.0
        %480 = vmatpush1.msra.mxu0 0.0
        %481 = vmatprep.subr.mxu0 0.0
        %482 = vmatpush1.msra.mxu0 0.0
        %483 = vmatprep.subr.mxu0 0.0
        %484 = vmatpush1.msra.mxu0 0.0
        %485 = vmatprep.subr.mxu0 0.0
        %486 = vmatpush1.msra.mxu0 0.0
        %487 = vmatprep.subr.mxu0 0.0
        %488 = vmatpush1.msra.mxu0 0.0
        %489 = vmatprep.subr.mxu0 0.0
        %490 = vmatpush1.msra.mxu0 0.0
        %491 = vmatprep.subr.mxu0 0.0
        %492 = vmatpush1.msra.mxu0 0.0
        %493 = vmatprep.subr.mxu0 0.0
        %494 = vmatpush1.msra.mxu0 0.0
        %495 = vmatprep.subr.mxu0 0.0
        %496 = vmatpush1.msra.mxu0 0.0
        %497 = vmatprep.subr.mxu0 0.0
        %498 = vmatpush1.msra.mxu0 0.0
        %499 = vmatprep.subr.mxu0 0.0
        %500 = vmatpush1.msra.mxu0 0.0
        %501 = vmatprep.subr.mxu0 0.0
        %502 = vmatpush1.msra.mxu0 %v461
        %503 = vmatprep.subr.mxu0 0.0
        %504 = vmatpush1.msra.mxu0 %v460
        %505 = vmatprep.subr.mxu0 0.0
        %506 = vmatpush2.msra.mxu0 0.0
        %507 = vmatprep.subr.mxu0 0.0
        %508 = vmatpush2.msra.mxu0 0.0
        %509 = vmatprep.subr.mxu0 0.0
        %510 = vmatpush2.msra.mxu0 0.0
        %511 = vmatprep.subr.mxu0 0.0
        %512 = vmatpush2.msra.mxu0 0.0
        %513 = vmatprep.subr.mxu0 0.0
        %514 = vmatpush2.msra.mxu0 0.0
        %515 = vmatprep.subr.mxu0 0.0
        %516 = vmatpush2.msra.mxu0 0.0
        %517 = vmatprep.subr.mxu0 0.0
        %518 = vmatpush2.msra.mxu0 0.0
        %519 = vmatprep.subr.mxu0 0.0
        %520 = vmatpush2.msra.mxu0 0.0
        %521 = vmatprep.subr.mxu0 0.0
        %522 = vmatpush2.msra.mxu0 0.0
        %523 = vmatprep.subr.mxu0 0.0
        %524 = vmatpush2.msra.mxu0 0.0
        %525 = vmatprep.subr.mxu0 0.0
        %526 = vmatpush2.msra.mxu0 0.0
        %527 = vmatprep.subr.mxu0 0.0
        %528 = vmatpush2.msra.mxu0 0.0
        %529 = vmatprep.subr.mxu0 0.0
        %530 = vmatpush2.msra.mxu0 0.0
        %531 = vmatprep.subr.mxu0 0.0
        %532 = vmatpush2.msra.mxu0 0.0
        %533 = vmatprep.subr.mxu0 0.0
        %534 = vmatpush2.msra.mxu0 0.0
        %535 = vmatprep.subr.mxu0 0.0
        %536 = vmatpush2.msra.mxu0 0.0
        %537 = vmatprep.mubr.f32.mxu0 0.0
        %538 = vmatmul.mubr.f32.gmra.mxu0 %v471
        %v539 = vpop.f32.mrf.mxu0
        %v540 = vadd.f32 %v467, %v539
        %v541 = vpop.f32.mrf.mxu0
        %542 = vdwg.mxu0
        %v543 = vmax.f32 %v540, 0.0
        %v544 = vld [vmem:[%s5] sm:$0x1]
        %v545 = vld [vmem:[#allocation2] sm:$0x1]
        %547 = vset.pattern.permute.xlu0 0
        %548 = vperm.xlu0 %547, %v545
        %v549 = vpop.permute.xlu0 %548
        %v551 = vlaneseq
        %v552 = vshrl.u32 %v551, 7
        %v553 = vsub.s32 0, %v552
        %v554 = vrot.slane %v549, %v553
        %vm555 = vcmask 64512
        %v557 = vsel %vm555, %v544, 0
        %559 = vmatprep.subr.mxu0 0.0
        %560 = vmatpush1.msra.mxu0 0.0
        %561 = vmatprep.subr.mxu0 0.0
        %562 = vmatpush1.msra.mxu0 0.0
        %563 = vmatprep.subr.mxu0 0.0
        %564 = vmatpush1.msra.mxu0 0.0
        %565 = vmatprep.subr.mxu0 0.0
        %566 = vmatpush1.msra.mxu0 0.0
        %567 = vmatprep.subr.mxu0 0.0
        %568 = vmatpush1.msra.mxu0 0.0
        %569 = vmatprep.subr.mxu0 0.0
        %570 = vmatpush1.msra.mxu0 0.0
        %571 = vmatprep.subr.mxu0 0.0
        %572 = vmatpush1.msra.mxu0 0.0
        %573 = vmatprep.subr.mxu0 0.0
        %574 = vmatpush1.msra.mxu0 0.0
        %575 = vmatprep.subr.mxu0 0.0
        %576 = vmatpush1.msra.mxu0 0.0
        %577 = vmatprep.subr.mxu0 0.0
        %578 = vmatpush1.msra.mxu0 0.0
        %579 = vmatprep.subr.mxu0 0.0
        %580 = vmatpush1.msra.mxu0 0.0
        %581 = vmatprep.subr.mxu0 0.0
        %582 = vmatpush1.msra.mxu0 0.0
        %583 = vmatprep.subr.mxu0 0.0
        %584 = vmatpush1.msra.mxu0 0.0
        %585 = vmatprep.subr.mxu0 0.0
        %586 = vmatpush1.msra.mxu0 0.0
        %587 = vmatprep.subr.mxu0 0.0
        %588 = vmatpush1.msra.mxu0 0.0
        %589 = vmatprep.subr.mxu0 0.0
        %590 = vmatpush1.msra.mxu0 %v543
        %591 = vmatprep.subr.mxu0 0.0
        %592 = vmatpush2.msra.mxu0 0.0
        %593 = vmatprep.subr.mxu0 0.0
        %594 = vmatpush2.msra.mxu0 0.0
        %595 = vmatprep.subr.mxu0 0.0
        %596 = vmatpush2.msra.mxu0 0.0
        %597 = vmatprep.subr.mxu0 0.0
        %598 = vmatpush2.msra.mxu0 0.0
        %599 = vmatprep.subr.mxu0 0.0
        %600 = vmatpush2.msra.mxu0 0.0
        %601 = vmatprep.subr.mxu0 0.0
        %602 = vmatpush2.msra.mxu0 0.0
        %603 = vmatprep.subr.mxu0 0.0
        %604 = vmatpush2.msra.mxu0 0.0
        %605 = vmatprep.subr.mxu0 0.0
        %606 = vmatpush2.msra.mxu0 0.0
        %607 = vmatprep.subr.mxu0 0.0
        %608 = vmatpush2.msra.mxu0 0.0
        %609 = vmatprep.subr.mxu0 0.0
        %610 = vmatpush2.msra.mxu0 0.0
        %611 = vmatprep.subr.mxu0 0.0
        %612 = vmatpush2.msra.mxu0 0.0
        %613 = vmatprep.subr.mxu0 0.0
        %614 = vmatpush2.msra.mxu0 0.0
        %615 = vmatprep.subr.mxu0 0.0
        %616 = vmatpush2.msra.mxu0 0.0
        %617 = vmatprep.subr.mxu0 0.0
        %618 = vmatpush2.msra.mxu0 0.0
        %619 = vmatprep.subr.mxu0 0.0
        %620 = vmatpush2.msra.mxu0 0.0
        %621 = vmatprep.subr.mxu0 0.0
        %622 = vmatpush2.msra.mxu0 0.0
        %623 = vmatprep.mubr.f32.mxu0 0.0
        %624 = vmatmul.mubr.f32.gmra.mxu0 %v557
        %v625 = vpop.f32.mrf.mxu0
        %v626 = vadd.f32 %v554, %v625
        %v627 = vpop.f32.mrf.mxu0
        %628 = vdwg.mxu0
        %v629 = vxor.u32 %v626, 2147483648
        %v630 = vmul.f32 %v629, 1.442695
        %v631 = vpow.pop %v630
        %v632 = vadd.f32 %v631, 1.0
        %v633 = vrcp.pop %v632
        %v634 = vmul.f32 1.0, %v633
        %635 = vst [vmem:[%s285] sm:$0x1] %v634
        %s636 = sand.u32 %s183, 1
        %s637 = scalar_lea.sflag [#allocation4], %s636
        %s638 = sand.u32 %s183, 1
        %s639 = scalar_lea.vmem [#allocation3], %s638
        // Predicated region
        $region49: #{tpu_custom_call.1} parent=47 // pred_check
          %p640 = pneg %p193
        $region50: #{tpu_custom_call.1} parent=47 // pred_check_branch
          %642 = sbr.rel (%p640) target = $region52
        $region51: #{tpu_custom_call.1} parent=47 // pred_region
          %s644 = ssub.s32 16, 16
          %645 = vsyncadd %s637, %s644
          %s646 = smul.addr %s23, 16
          %s647 = scalar_lea.hbm %s7, %s646
          %s649 = sshll.u32 %s639, 4
          %s650 = int_to_ptr.vmem [resolvable:$true] %s649
          %652 = dma.vmem_to_hbm [thread:$0]  %s650, 16, %s647, %s637
        $region52: #{tpu_custom_call.1} parent=47 // pred_fallthru
          _
      $region48: #{tpu_custom_call.1} parent=5 // pred_fallthru
        _
      %p653 = scmp.le.s32.totalorder 2, %s18
      // Predicated region
      $region53: #{tpu_custom_call.1} parent=5 // pred_check
        %p654 = pneg %p653
      $region54: #{tpu_custom_call.1} parent=5 // pred_check_branch
        %656 = sbr.rel (%p654) target = $region56
      $region55: #{tpu_custom_call.1} parent=5 // pred_region
        %s657 = ssub.s32 %s18, 2
        // Predicated region
        $region57: #{tpu_custom_call.1} parent=55 // pred_check
          %p658 = pneg %p199
        $region58: #{tpu_custom_call.1} parent=55 // pred_check_branch
          %660 = sbr.rel (%p658) target = $region60
        $region59: #{tpu_custom_call.1} parent=55 // pred_region
          %s661 = sand.u32 %s184, 1
          %s662 = scalar_lea.sflag [#allocation4], %s661
          %s663 = sand.u32 %s184, 1
          %s664 = scalar_lea.vmem [#allocation3], %s663
          %665 = dma.done %s662, 16
        $region60: #{tpu_custom_call.1} parent=55 // pred_fallthru
          _
      $region56: #{tpu_custom_call.1} parent=5 // pred_fallthru
        _
    $region6: #{tpu_custom_call.1} parent=1 // loop_footer
      %s22 = sadd.s32 1, %s18
    $region7: #{tpu_custom_call.1} parent=1 // loop_footer_branch
      %17 = sbr.rel target = $region3
    $region8: #{tpu_custom_call.1} parent=1 // loop_exit
      _
    %666 = vsyncpa [#allocation4], 1
    %s667 = scalar_lea.sflag [#allocation4], 1
    %668 = vsyncpa %s667, 1

</llo_original>
